<compile_context>
chip_gen: v7x
topology: tpu7x:2x2x1
jax: 0.10.0
libtpu: 0.0.40
codegen_flags: <defaults>
</compile_context>

<pallas_src>
import functools

import jax
import jax.numpy as jnp
import numpy as np
from jax import lax
from jax.experimental import pallas as pl
from jax.experimental.pallas import tpu as pltpu

_EPS = 1e-12            # torch.nn.functional.normalize default eps
_MAX_TILE_ROWS = 256    # batch rows per grid step (review: 128-512)


def _round_up(x, m):
    return ((x + m - 1) // m) * m


def _w2v_kernel(widx_ref, sidx_ref, ivec_ref, svec_ref, out_ref, *,
                alpha, vocab_size, sememes_size, n_sememes):
    # widx_ref : VMEM (tb, 1)   int32  word index per batch row
    # sidx_ref : VMEM (tb, S)   int32  sememe indices per batch row
    # ivec_ref : VMEM (V, E)    f32    resident word embedding table
    # svec_ref : VMEM (Sm, E)   f32    resident sememe embedding table
    # out_ref  : VMEM (tb, E)   f32    output tile for this grid step
    tb = out_ref.shape[0]

    # ---- word vectors: one-hot (tb, V) @ (V, E) on the MXU ----------------
    widx = widx_ref[...]                                        # (tb, 1)
    v_iota = lax.broadcasted_iota(jnp.int32, (tb, vocab_size), 1)
    onehot_w = (widx == v_iota).astype(jnp.float32)             # (tb, V)
    wordvec = jnp.dot(onehot_w, ivec_ref[...],
                      preferred_element_type=jnp.float32)       # (tb, E)

    # ---- sememe sum: multi-hot counts (tb, Sm) @ (Sm, E) on the MXU -------
    sidx = sidx_ref[...]                                        # (tb, S)
    s_iota = lax.broadcasted_iota(jnp.int32, (tb, sememes_size), 1)
    counts = jnp.zeros((tb, sememes_size), jnp.float32)
    for s in range(n_sememes):                                  # S small & static
        counts = counts + (sidx[:, s:s + 1] == s_iota).astype(jnp.float32)
    ssum = jnp.dot(counts, svec_ref[...],
                   preferred_element_type=jnp.float32)          # (tb, E)

    # ---- L2 normalize: x / max(||x||, eps) == x * rsqrt(max(sum x^2, eps^2))
    sumsq = jnp.sum(ssum * ssum, axis=1, keepdims=True)         # (tb, 1)
    inv_norm = lax.rsqrt(jnp.maximum(sumsq, _EPS * _EPS))
    sememevec = ssum * inv_norm

    out_ref[...] = (alpha * wordvec
                    + (1.0 - alpha) * sememevec).astype(out_ref.dtype)


def word2vec_forward_i(data, widx2sidxs, ivec_w, svec_w, alpha=0.5):
    """Pallas implementation of Word2Vec.forward_i."""
    widx = jnp.asarray(data).astype(jnp.int32)                  # (B,)
    sidxs = jnp.asarray(widx2sidxs)[widx].astype(jnp.int32)     # glue: (B, S)
    ivec_w = jnp.asarray(ivec_w, dtype=jnp.float32)             # (V, E)
    svec_w = jnp.asarray(svec_w, dtype=jnp.float32)             # (Sm, E)

    B = widx.shape[0]
    V, E = ivec_w.shape
    Sm = svec_w.shape[0]
    S = sidxs.shape[1]

    # Batch tile: as large as reasonable (amortizes ~600-cycle grid overhead),
    # but never padding a small batch up to a huge tile.
    tb = min(_MAX_TILE_ROWS, _round_up(B, 8))
    B_pad = _round_up(B, tb)
    if B_pad != B:
        pad = B_pad - B
        widx = jnp.concatenate([widx, jnp.zeros((pad,), jnp.int32)])
        sidxs = jnp.concatenate([sidxs, jnp.zeros((pad, S), jnp.int32)])
    widx2d = widx.reshape(B_pad, 1)

    kernel = functools.partial(_w2v_kernel, alpha=float(alpha),
                               vocab_size=V, sememes_size=Sm, n_sememes=S)

    grid_spec = pltpu.PrefetchScalarGridSpec(
        num_scalar_prefetch=0,
        grid=(B_pad // tb,),
        in_specs=[
            pl.BlockSpec((tb, 1), lambda i: (i, 0)),   # word indices (per tile)
            pl.BlockSpec((tb, S), lambda i: (i, 0)),   # sememe indices (per tile)
            pl.BlockSpec((V, E), lambda i: (0, 0)),    # resident word table
            pl.BlockSpec((Sm, E), lambda i: (0, 0)),   # resident sememe table
        ],
        out_specs=pl.BlockSpec((tb, E), lambda i: (i, 0)),
    )

    # Only raise the scoped-VMEM limit if the resident tables actually need it
    # (keeps v5e/v6e/v7x default budgets for the common small-table case).
    table_bytes = (ivec_w.size + svec_w.size) * 4
    compiler_kwargs = dict(dimension_semantics=("parallel",))
    if table_bytes > (24 << 20):
        compiler_kwargs["vmem_limit_bytes"] = min(table_bytes + (16 << 20),
                                                  112 << 20)

    out = pl.pallas_call(
        kernel,
        out_shape=jax.ShapeDtypeStruct((B_pad, E), jnp.float32),
        grid_spec=grid_spec,
        compiler_params=pltpu.CompilerParams(**compiler_kwargs),
    )(widx2d, sidxs, ivec_w, svec_w)
    return out[:B]


def _reference(data, widx2sidxs, ivec_w, svec_w, alpha=0.5):
    v = data.astype(jnp.int32)
    s = widx2sidxs[v]
    wordvec = ivec_w[v]
    ssum = svec_w[s].sum(axis=1)
    norm = jnp.sqrt(jnp.sum(ssum * ssum, axis=1, keepdims=True))
    sememevec = ssum / jnp.maximum(norm, _EPS)
    return alpha * wordvec + (1.0 - alpha) * sememevec


if __name__ == "__main__":
    # Small, module-consistent shapes.
    VOCAB = 64          # vocab_size
    SEMEMES = 32        # sememes_size
    EMB = 128           # embedding_size
    S_PER_WORD = 4      # sememes per word (second dim of widx2sidxs)
    BATCH = 10          # not a multiple of 8 -> exercises the tail-padding path
    ALPHA = 0.5

    key = jax.random.PRNGKey(0)
    k_w, k_s, k_map, k_data = jax.random.split(key, 4)

    # Deterministic "parameters" (matches __init__ shapes; no checkpoint load).
    wordvec_table = jax.random.normal(k_w, (VOCAB, EMB), dtype=jnp.float32)
    svec_table = jax.random.uniform(
        k_s, (SEMEMES, EMB), dtype=jnp.float32,
        minval=-0.5 / EMB, maxval=0.5 / EMB)
    widx2sidxs = jax.random.randint(k_map, (VOCAB, S_PER_WORD), 0, SEMEMES,
                                    dtype=jnp.int32)
    data = jax.random.randint(k_data, (BATCH,), 0, VOCAB, dtype=jnp.int32)

    out = word2vec_forward_i(data, widx2sidxs, wordvec_table, svec_table,
                             alpha=ALPHA)
    out = jax.block_until_ready(out)

    ref = _reference(data, widx2sidxs, wordvec_table, svec_table, alpha=ALPHA)
    np.testing.assert_allclose(np.asarray(out), np.asarray(ref),
                               rtol=1e-5, atol=1e-5)
    print("KERNEL_OK")
</pallas_src>

<mosaic_0001>
module attributes {stable_mosaic.version = 11 : i64} {
  func.func @_w2v_kernel(%arg0: i32, %arg1: memref<16x1xi32, #tpu.memory_space<vmem>>, %arg2: memref<16x4xi32, #tpu.memory_space<vmem>>, %arg3: memref<64x128xf32, #tpu.memory_space<vmem>>, %arg4: memref<32x128xf32, #tpu.memory_space<vmem>>, %arg5: memref<16x128xf32, #tpu.memory_space<vmem>>) attributes {dimension_semantics = [#tpu.dimension_semantics<parallel>], iteration_bounds = array<i64: 1>, scalar_prefetch = 0 : i64, scratch_operands = 0 : i64, tpu.core_type = #tpu.core_type<tc>, window_params = [{transform_indices = @transform_0, window_bounds = array<i64: 16, 1>}, {transform_indices = @transform_1, window_bounds = array<i64: 16, 4>}, {pipeline_mode = #tpu.pipeline_mode<synchronous>, transform_indices = @transform_2, window_bounds = array<i64: 64, 128>}, {pipeline_mode = #tpu.pipeline_mode<synchronous>, transform_indices = @transform_3, window_bounds = array<i64: 32, 128>}, {transform_indices = @transform_4, window_bounds = array<i64: 16, 128>}]} {
    %c0 = arith.constant 0 : index
    %c0_0 = arith.constant 0 : index
    %0 = vector.load %arg1[%c0, %c0_0] : memref<16x1xi32, #tpu.memory_space<vmem>>, vector<16x1xi32>
    %1 = tpu.iota {dimensions = array<i32: 1>} : vector<16x64xi32>
    %2 = vector.broadcast %0 : vector<16x1xi32> to vector<16x64xi32>
    %3 = arith.cmpi eq, %2, %1 : vector<16x64xi32>
    %4 = arith.extui %3 : vector<16x64xi1> to vector<16x64xi32>
    %5 = arith.sitofp %4 : vector<16x64xi32> to vector<16x64xf32>
    %c0_1 = arith.constant 0 : index
    %c0_2 = arith.constant 0 : index
    %6 = vector.load %arg3[%c0_1, %c0_2] : memref<64x128xf32, #tpu.memory_space<vmem>>, vector<64x128xf32>
    %cst = arith.constant dense<0.000000e+00> : vector<16x128xf32>
    %7 = tpu.matmul %5, %6, %cst {dimension_numbers = #tpu.dot_dimension_numbers<[1], [0], [0], [1], [0, 0, 1, 1], [], []>} : vector<16x64xf32>, vector<64x128xf32>, vector<16x128xf32> -> vector<16x128xf32>
    %c0_3 = arith.constant 0 : index
    %c0_4 = arith.constant 0 : index
    %8 = vector.load %arg2[%c0_3, %c0_4] : memref<16x4xi32, #tpu.memory_space<vmem>>, vector<16x4xi32>
    %9 = tpu.iota {dimensions = array<i32: 1>} : vector<16x32xi32>
    %cst_5 = arith.constant 0.000000e+00 : f32
    %10 = vector.broadcast %cst_5 : f32 to vector<16x32xf32>
    %11 = vector.extract_strided_slice %8 {offsets = [0, 0], sizes = [16, 1], strides = [1, 1]} : vector<16x4xi32> to vector<16x1xi32>
    %12 = vector.broadcast %11 : vector<16x1xi32> to vector<16x32xi32>
    %13 = arith.cmpi eq, %12, %9 : vector<16x32xi32>
    %14 = arith.extui %13 : vector<16x32xi1> to vector<16x32xi32>
    %15 = arith.sitofp %14 : vector<16x32xi32> to vector<16x32xf32>
    %16 = arith.addf %10, %15 : vector<16x32xf32>
    %17 = vector.extract_strided_slice %8 {offsets = [0, 1], sizes = [16, 1], strides = [1, 1]} : vector<16x4xi32> to vector<16x1xi32>
    %18 = vector.broadcast %17 : vector<16x1xi32> to vector<16x32xi32>
    %19 = arith.cmpi eq, %18, %9 : vector<16x32xi32>
    %20 = arith.extui %19 : vector<16x32xi1> to vector<16x32xi32>
    %21 = arith.sitofp %20 : vector<16x32xi32> to vector<16x32xf32>
    %22 = arith.addf %16, %21 : vector<16x32xf32>
    %23 = vector.extract_strided_slice %8 {offsets = [0, 2], sizes = [16, 1], strides = [1, 1]} : vector<16x4xi32> to vector<16x1xi32>
    %24 = vector.broadcast %23 : vector<16x1xi32> to vector<16x32xi32>
    %25 = arith.cmpi eq, %24, %9 : vector<16x32xi32>
    %26 = arith.extui %25 : vector<16x32xi1> to vector<16x32xi32>
    %27 = arith.sitofp %26 : vector<16x32xi32> to vector<16x32xf32>
    %28 = arith.addf %22, %27 : vector<16x32xf32>
    %29 = vector.extract_strided_slice %8 {offsets = [0, 3], sizes = [16, 1], strides = [1, 1]} : vector<16x4xi32> to vector<16x1xi32>
    %30 = vector.broadcast %29 : vector<16x1xi32> to vector<16x32xi32>
    %31 = arith.cmpi eq, %30, %9 : vector<16x32xi32>
    %32 = arith.extui %31 : vector<16x32xi1> to vector<16x32xi32>
    %33 = arith.sitofp %32 : vector<16x32xi32> to vector<16x32xf32>
    %34 = arith.addf %28, %33 : vector<16x32xf32>
    %c0_6 = arith.constant 0 : index
    %c0_7 = arith.constant 0 : index
    %35 = vector.load %arg4[%c0_6, %c0_7] : memref<32x128xf32, #tpu.memory_space<vmem>>, vector<32x128xf32>
    %cst_8 = arith.constant dense<0.000000e+00> : vector<16x128xf32>
    %36 = tpu.matmul %34, %35, %cst_8 {dimension_numbers = #tpu.dot_dimension_numbers<[1], [0], [0], [1], [0, 0, 1, 1], [], []>} : vector<16x32xf32>, vector<32x128xf32>, vector<16x128xf32> -> vector<16x128xf32>
    %37 = arith.mulf %36, %36 : vector<16x128xf32>
    %cst_9 = arith.constant dense<0.000000e+00> : vector<16xf32>
    %38 = vector.multi_reduction <add>, %37, %cst_9 [1] : vector<16x128xf32> to vector<16xf32>
    %39 = vector.shape_cast %38 : vector<16xf32> to vector<16x1xf32>
    %cst_10 = arith.constant 1.000000e-24 : f32
    %40 = vector.broadcast %cst_10 : f32 to vector<16x1xf32>
    %41 = arith.maximumf %39, %40 : vector<16x1xf32>
    %42 = math.rsqrt %41 : vector<16x1xf32>
    %43 = vector.broadcast %42 : vector<16x1xf32> to vector<16x128xf32>
    %44 = arith.mulf %36, %43 : vector<16x128xf32>
    %cst_11 = arith.constant 5.000000e-01 : f32
    %45 = vector.broadcast %cst_11 : f32 to vector<16x128xf32>
    %46 = arith.mulf %45, %7 : vector<16x128xf32>
    %cst_12 = arith.constant 5.000000e-01 : f32
    %47 = vector.broadcast %cst_12 : f32 to vector<16x128xf32>
    %48 = arith.mulf %47, %44 : vector<16x128xf32>
    %49 = arith.addf %46, %48 : vector<16x128xf32>
    %c0_13 = arith.constant 0 : index
    %c0_14 = arith.constant 0 : index
    %50 = vector.load %arg5[%c0_13, %c0_14] : memref<16x128xf32, #tpu.memory_space<vmem>>, vector<16x128xf32>
    tpu.vector_store %arg5[%c0_13, %c0_14], %49 {strides = array<i32>} : memref<16x128xf32, #tpu.memory_space<vmem>>, vector<16x128xf32>,
    return
  }
  func.func @transform_0(%arg0: i32) -> (i32, i32) {
    %c0_i32 = arith.constant 0 : i32
    %c0_i32_0 = arith.constant 0 : i32
    return %arg0, %c0_i32 : i32, i32
  }
  func.func @transform_1(%arg0: i32) -> (i32, i32) {
    %c0_i32 = arith.constant 0 : i32
    %c0_i32_0 = arith.constant 0 : i32
    return %arg0, %c0_i32 : i32, i32
  }
  func.func @transform_2(%arg0: i32) -> (i32, i32) {
    %c0_i32 = arith.constant 0 : i32
    %c0_i32_0 = arith.constant 0 : i32
    %c0_i32_1 = arith.constant 0 : i32
    return %c0_i32, %c0_i32_0 : i32, i32
  }
  func.func @transform_3(%arg0: i32) -> (i32, i32) {
    %c0_i32 = arith.constant 0 : i32
    %c0_i32_0 = arith.constant 0 : i32
    %c0_i32_1 = arith.constant 0 : i32
    return %c0_i32, %c0_i32_0 : i32, i32
  }
  func.func @transform_4(%arg0: i32) -> (i32, i32) {
    %c0_i32 = arith.constant 0 : i32
    %c0_i32_0 = arith.constant 0 : i32
    return %arg0, %c0_i32 : i32, i32
  }
}

</mosaic_0001>

<llo_original>
// kernel: tpu_custom_call.1
$region0: #{tpu_custom_call.1}
  #allocation0 [shape = 'u32[]', space=smem, size = 0x4, offset = 0x4, fixed_abs, tag = 'smem constant byte address 0x4 - core index']
  #allocation1 [shape = 'u32[144,128]{1,0:T(1,128)}', space=vmem, size = 0x12000, scoped, tag = 'internal scratch']
  %s0 = inlined_call_operand.vmem [shape: s32[16,1], index: 0, kind: input, shape index: {}]
  %s1 = inlined_call_operand.vmem [shape: s32[16,4], index: 1, kind: input, shape index: {}]
  %s2 = inlined_call_operand.hbm [shape: f32[64,128], index: 2, kind: input, shape index: {}]
  %s3 = inlined_call_operand.vmem [shape: f32[32,128], index: 3, kind: input, shape index: {}]
  %s4 = inlined_call_operand.hbm [shape: f32[16,128], index: 4, kind: output, shape index: {}]
  %s5 = sld [smem:[#allocation0]]
  $region30: #{tpu_custom_call.1} parent=0
    _
  %s7 = ssub.s32 1, %s5
  %s8 = scalar_select 0, %s7, %s5
  $region1: #{tpu_custom_call.1} parent=0
    #allocation2 [shape = 'u8[32768]{0}', space=vmem, size = 0x8000, scoped, tag = 'input window, operand 2, single buffered']
    #allocation3 [shape = 's32[1]{0}', space=sflag, size = 0x4, scoped, tag = 'scoped memory for tpu_custom_call.1']
    #allocation4 [shape = 's32[1]{0}', space=sflag, size = 0x4, scoped, tag = 'scoped memory for tpu_custom_call.1']
    #allocation5 [shape = 'u8[8192]{0}', space=vmem, size = 0x2000, scoped, tag = 'output window, operand 0, single buffered']
    %9 = vsyncpa [#allocation3], 0
    %10 = vsyncpa [#allocation4], 0
    // Predicated region
    $region2: #{tpu_custom_call.1} parent=1 // pred_check
      _
    $region3: #{tpu_custom_call.1} parent=1 // pred_check_branch
      %12 = sbr.rel (0) target = $region5
    $region4: #{tpu_custom_call.1} parent=1 // pred_region
      _
    $region5: #{tpu_custom_call.1} parent=1 // pred_fallthru
      _
    // Predicated region
    $region6: #{tpu_custom_call.1} parent=1 // pred_check
      _
    $region7: #{tpu_custom_call.1} parent=1 // pred_check_branch
      %14 = sbr.rel (0) target = $region9
    $region8: #{tpu_custom_call.1} parent=1 // pred_region
      _
    $region9: #{tpu_custom_call.1} parent=1 // pred_fallthru
      _
    // Predicated region
    $region10: #{tpu_custom_call.1} parent=1 // pred_check
      _
    $region11: #{tpu_custom_call.1} parent=1 // pred_check_branch
      %16 = sbr.rel (0) target = $region13
    $region12: #{tpu_custom_call.1} parent=1 // pred_region
      %s18 = ssub.s32 1024, 1024
      %19 = vsyncadd [#allocation3], %s18
      %s20 = sshll.u32 [#allocation2], 4
      %s21 = int_to_ptr.vmem [resolvable:$true] %s20
      %26 = dma.hbm_to_vmem [thread:$0]  %s2, 1024, %s21, [#allocation3], 128, 128, 8
    $region13: #{tpu_custom_call.1} parent=1 // pred_fallthru
      _
    // Predicated region
    $region14: #{tpu_custom_call.1} parent=1 // pred_check
      _
    $region15: #{tpu_custom_call.1} parent=1 // pred_check_branch
      %28 = sbr.rel (0) target = $region17
    $region16: #{tpu_custom_call.1} parent=1 // pred_region
      _
    $region17: #{tpu_custom_call.1} parent=1 // pred_fallthru
      _
    // Predicated region
    $region18: #{tpu_custom_call.1} parent=1 // pred_check
      _
    $region19: #{tpu_custom_call.1} parent=1 // pred_check_branch
      %30 = sbr.rel (0) target = $region21
    $region20: #{tpu_custom_call.1} parent=1 // pred_region
      %31 = dma.done [#allocation3], 1024
    $region21: #{tpu_custom_call.1} parent=1 // pred_fallthru
      _
    %v32 = vld [vmem:[%s0] sm:$0xff]
    %v33 = vld [vmem:[%s0 + $0x8] sm:$0xff]
    %v34 = vlaneseq
    %v35 = vand.u32 %v34, 127
    %36 = vset.pattern.permute.xlu0 0
    %37 = vperm.xlu0 %36, %v32
    %v38 = vpop.permute.xlu0 %37
    %39 = vset.pattern.permute.xlu0 0
    %40 = vperm.xlu0 %39, %v33
    %v41 = vpop.permute.xlu0 %40
    %vm42 = vcmp.eq.s32.totalorder %v38, %v35
    %vm43 = vcmp.eq.s32.totalorder %v41, %v35
    %v44 = vsel %vm42, 1, 0
    %v45 = vsel %vm43, 1, 0
    %v46 = vcvt.s32.f32 %v44
    %v47 = vcvt.s32.f32 %v45
    %v48 = vld [vmem:[#allocation2] sm:$0xff]
    %v49 = vld [vmem:[#allocation2 + $0x8] sm:$0xff]
    %v50 = vld [vmem:[#allocation2 + $0x10] sm:$0xff]
    %v51 = vld [vmem:[#allocation2 + $0x18] sm:$0xff]
    %v52 = vld [vmem:[#allocation2 + $0x20] sm:$0xff]
    %v53 = vld [vmem:[#allocation2 + $0x28] sm:$0xff]
    %v54 = vld [vmem:[#allocation2 + $0x30] sm:$0xff]
    %v55 = vld [vmem:[#allocation2 + $0x38] sm:$0xff]
    %vm56 = vcmask 523264
    %v58 = vsel %vm56, %v46, 0
    %v61 = vsel %vm56, %v47, 0
    %63 = vmatprep.subr.mxu0 0.0
    %64 = vmatpush1.msra.mxu0 %v48
    %65 = vmatprep.subr.mxu0 0.0
    %66 = vmatpush1.msra.mxu0 %v49
    %67 = vmatprep.subr.mxu0 0.0
    %68 = vmatpush1.msra.mxu0 %v50
    %69 = vmatprep.subr.mxu0 0.0
    %70 = vmatpush1.msra.mxu0 %v51
    %71 = vmatprep.subr.mxu0 0.0
    %72 = vmatpush1.msra.mxu0 %v52
    %73 = vmatprep.subr.mxu0 0.0
    %74 = vmatpush1.msra.mxu0 %v53
    %75 = vmatprep.subr.mxu0 0.0
    %76 = vmatpush1.msra.mxu0 %v54
    %77 = vmatprep.subr.mxu0 0.0
    %78 = vmatpush1.msra.mxu0 %v55
    %79 = vmatprep.subr.mxu0 0.0
    %80 = vmatpush1.msra.mxu0 0.0
    %81 = vmatprep.subr.mxu0 0.0
    %82 = vmatpush1.msra.mxu0 0.0
    %83 = vmatprep.subr.mxu0 0.0
    %84 = vmatpush1.msra.mxu0 0.0
    %85 = vmatprep.subr.mxu0 0.0
    %86 = vmatpush1.msra.mxu0 0.0
    %87 = vmatprep.subr.mxu0 0.0
    %88 = vmatpush1.msra.mxu0 0.0
    %89 = vmatprep.subr.mxu0 0.0
    %90 = vmatpush1.msra.mxu0 0.0
    %91 = vmatprep.subr.mxu0 0.0
    %92 = vmatpush1.msra.mxu0 0.0
    %93 = vmatprep.subr.mxu0 0.0
    %94 = vmatpush1.msra.mxu0 0.0
    %95 = vmatprep.subr.mxu0 0.0
    %96 = vmatpush1.msra.mxu0 0.0
    %97 = vmatprep.subr.mxu0 0.0
    %98 = vmatpush1.msra.mxu0 0.0
    %99 = vmatprep.subr.mxu0 0.0
    %100 = vmatpush1.msra.mxu0 0.0
    %101 = vmatprep.subr.mxu0 0.0
    %102 = vmatpush1.msra.mxu0 0.0
    %103 = vmatprep.subr.mxu0 0.0
    %104 = vmatpush1.msra.mxu0 0.0
    %105 = vmatprep.subr.mxu0 0.0
    %106 = vmatpush1.msra.mxu0 0.0
    %107 = vmatprep.subr.mxu0 0.0
    %108 = vmatpush1.msra.mxu0 0.0
    %109 = vmatprep.subr.mxu0 0.0
    %110 = vmatpush1.msra.mxu0 0.0
    %111 = vmatprep.subr.mxu0 0.0
    %112 = vmatpush1.msra.mxu0 0.0
    %113 = vmatprep.subr.mxu0 0.0
    %114 = vmatpush1.msra.mxu0 0.0
    %115 = vmatprep.subr.mxu0 0.0
    %116 = vmatpush1.msra.mxu0 0.0
    %117 = vmatprep.subr.mxu0 0.0
    %118 = vmatpush1.msra.mxu0 0.0
    %119 = vmatprep.subr.mxu0 0.0
    %120 = vmatpush1.msra.mxu0 0.0
    %121 = vmatprep.subr.mxu0 0.0
    %122 = vmatpush1.msra.mxu0 0.0
    %123 = vmatprep.subr.mxu0 0.0
    %124 = vmatpush1.msra.mxu0 0.0
    %125 = vmatprep.subr.mxu0 0.0
    %126 = vmatpush1.msra.mxu0 0.0
    %127 = vmatprep.mubr.f32.mxu0 0.0
    %128 = vmatmul.mubr.f32.gmra.mrb[0].mxu0 %v58
    %v129 = vpop.f32.mrb[0].mxu0
    %v130 = vadd.f32 0.0, %v129
    %v131 = vpop.f32.mrb[0].mxu0
    %132 = vmatprep.mubr.f32.mxu0 0.0
    %133 = vmatmul.mubr.f32.gmra.mrb[0].mxu0 %v61
    %v134 = vpop.f32.mrb[0].mxu0
    %v135 = vadd.f32 0.0, %v134
    %v136 = vpop.f32.mrb[0].mxu0
    %137 = vdwg.mxu0
    %v138 = vld [vmem:[%s1] sm:$0xff]
    %v139 = vld [vmem:[%s1 + $0x8] sm:$0xff]
    %140 = vset.pattern.permute.xlu0 0
    %141 = vperm.xlu0 %140, %v138
    %v142 = vpop.permute.xlu0 %141
    %143 = vset.pattern.permute.xlu0 0
    %144 = vperm.xlu0 %143, %v139
    %v145 = vpop.permute.xlu0 %144
    %vm146 = vcmp.eq.s32.totalorder %v142, %v35
    %vm147 = vcmp.eq.s32.totalorder %v145, %v35
    %v148 = vsel %vm146, 1, 0
    %v149 = vsel %vm147, 1, 0
    %v150 = vcvt.s32.f32 %v148
    %v151 = vcvt.s32.f32 %v149
    %v152 = vadd.f32 %v150, 0.0
    %v153 = vadd.f32 %v151, 0.0
    %154 = vset.pattern.permute.xlu0 1
    %155 = vperm.xlu0 %154, %v138
    %v156 = vpop.permute.xlu0 %155
    %157 = vset.pattern.permute.xlu0 1
    %158 = vperm.xlu0 %157, %v139
    %v159 = vpop.permute.xlu0 %158
    %vm160 = vcmp.eq.s32.totalorder %v156, %v35
    %vm161 = vcmp.eq.s32.totalorder %v159, %v35
    %v162 = vsel %vm160, 1, 0
    %v163 = vsel %vm161, 1, 0
    %v164 = vcvt.s32.f32 %v162
    %v165 = vcvt.s32.f32 %v163
    %v166 = vadd.f32 %v152, %v164
    %v167 = vadd.f32 %v153, %v165
    %168 = vset.pattern.permute.xlu0 2
    %169 = vperm.xlu0 %168, %v138
    %v170 = vpop.permute.xlu0 %169
    %171 = vset.pattern.permute.xlu0 2
    %172 = vperm.xlu0 %171, %v139
    %v173 = vpop.permute.xlu0 %172
    %vm174 = vcmp.eq.s32.totalorder %v170, %v35
    %vm175 = vcmp.eq.s32.totalorder %v173, %v35
    %v176 = vsel %vm174, 1, 0
    %v177 = vsel %vm175, 1, 0
    %v178 = vcvt.s32.f32 %v176
    %v179 = vcvt.s32.f32 %v177
    %v180 = vadd.f32 %v166, %v178
    %v181 = vadd.f32 %v167, %v179
    %182 = vset.pattern.permute.xlu0 3
    %183 = vperm.xlu0 %182, %v138
    %v184 = vpop.permute.xlu0 %183
    %185 = vset.pattern.permute.xlu0 3
    %186 = vperm.xlu0 %185, %v139
    %v187 = vpop.permute.xlu0 %186
    %vm188 = vcmp.eq.s32.totalorder %v184, %v35
    %vm189 = vcmp.eq.s32.totalorder %v187, %v35
    %v190 = vsel %vm188, 1, 0
    %v191 = vsel %vm189, 1, 0
    %v192 = vcvt.s32.f32 %v190
    %v193 = vcvt.s32.f32 %v191
    %v194 = vadd.f32 %v180, %v192
    %v195 = vadd.f32 %v181, %v193
    %v196 = vld [vmem:[%s3] sm:$0xff]
    %v197 = vld [vmem:[%s3 + $0x8] sm:$0xff]
    %v198 = vld [vmem:[%s3 + $0x10] sm:$0xff]
    %v199 = vld [vmem:[%s3 + $0x18] sm:$0xff]
    %vm200 = vcmask 261120
    %v202 = vsel %vm200, %v194, 0
    %v205 = vsel %vm200, %v195, 0
    %207 = vmatprep.subr.mxu0 0.0
    %208 = vmatpush1.msra.mxu0 %v196
    %209 = vmatprep.subr.mxu0 0.0
    %210 = vmatpush1.msra.mxu0 %v197
    %211 = vmatprep.subr.mxu0 0.0
    %212 = vmatpush1.msra.mxu0 %v198
    %213 = vmatprep.subr.mxu0 0.0
    %214 = vmatpush1.msra.mxu0 %v199
    %215 = vmatprep.subr.mxu0 0.0
    %216 = vmatpush1.msra.mxu0 0.0
    %217 = vmatprep.subr.mxu0 0.0
    %218 = vmatpush1.msra.mxu0 0.0
    %219 = vmatprep.subr.mxu0 0.0
    %220 = vmatpush1.msra.mxu0 0.0
    %221 = vmatprep.subr.mxu0 0.0
    %222 = vmatpush1.msra.mxu0 0.0
    %223 = vmatprep.subr.mxu0 0.0
    %224 = vmatpush1.msra.mxu0 0.0
    %225 = vmatprep.subr.mxu0 0.0
    %226 = vmatpush1.msra.mxu0 0.0
    %227 = vmatprep.subr.mxu0 0.0
    %228 = vmatpush1.msra.mxu0 0.0
    %229 = vmatprep.subr.mxu0 0.0
    %230 = vmatpush1.msra.mxu0 0.0
    %231 = vmatprep.subr.mxu0 0.0
    %232 = vmatpush1.msra.mxu0 0.0
    %233 = vmatprep.subr.mxu0 0.0
    %234 = vmatpush1.msra.mxu0 0.0
    %235 = vmatprep.subr.mxu0 0.0
    %236 = vmatpush1.msra.mxu0 0.0
    %237 = vmatprep.subr.mxu0 0.0
    %238 = vmatpush1.msra.mxu0 0.0
    %239 = vmatprep.subr.mxu0 0.0
    %240 = vmatpush1.msra.mxu0 0.0
    %241 = vmatprep.subr.mxu0 0.0
    %242 = vmatpush1.msra.mxu0 0.0
    %243 = vmatprep.subr.mxu0 0.0
    %244 = vmatpush1.msra.mxu0 0.0
    %245 = vmatprep.subr.mxu0 0.0
    %246 = vmatpush1.msra.mxu0 0.0
    %247 = vmatprep.subr.mxu0 0.0
    %248 = vmatpush1.msra.mxu0 0.0
    %249 = vmatprep.subr.mxu0 0.0
    %250 = vmatpush1.msra.mxu0 0.0
    %251 = vmatprep.subr.mxu0 0.0
    %252 = vmatpush1.msra.mxu0 0.0
    %253 = vmatprep.subr.mxu0 0.0
    %254 = vmatpush1.msra.mxu0 0.0
    %255 = vmatprep.subr.mxu0 0.0
    %256 = vmatpush1.msra.mxu0 0.0
    %257 = vmatprep.subr.mxu0 0.0
    %258 = vmatpush1.msra.mxu0 0.0
    %259 = vmatprep.subr.mxu0 0.0
    %260 = vmatpush1.msra.mxu0 0.0
    %261 = vmatprep.subr.mxu0 0.0
    %262 = vmatpush1.msra.mxu0 0.0
    %263 = vmatprep.subr.mxu0 0.0
    %264 = vmatpush1.msra.mxu0 0.0
    %265 = vmatprep.subr.mxu0 0.0
    %266 = vmatpush1.msra.mxu0 0.0
    %267 = vmatprep.subr.mxu0 0.0
    %268 = vmatpush1.msra.mxu0 0.0
    %269 = vmatprep.subr.mxu0 0.0
    %270 = vmatpush1.msra.mxu0 0.0
    %271 = vmatprep.mubr.f32.mxu0 0.0
    %272 = vmatmul.mubr.f32.gmra.mrb[0].mxu0 %v202
    %v273 = vpop.f32.mrb[0].mxu0
    %v274 = vadd.f32 0.0, %v273
    %v275 = vpop.f32.mrb[0].mxu0
    %276 = vmatprep.mubr.f32.mxu0 0.0
    %277 = vmatmul.mubr.f32.gmra.mrb[0].mxu0 %v205
    %v278 = vpop.f32.mrb[0].mxu0
    %v279 = vadd.f32 0.0, %v278
    %v280 = vpop.f32.mrb[0].mxu0
    %281 = vdwg.mxu0
    %v282 = vmul.f32 %v274, %v274
    %v283 = vmul.f32 %v279, %v279
    %284 = vadd.xlane.f32.xlu0 %v282
    %v285 = vpop.xlane.xlu0 %284
    %286 = vadd.xlane.f32.xlu0 %v283
    %v287 = vpop.xlane.xlu0 %286
    %v288 = vmax.f32 %v285, 1e-24
    %v289 = vmax.f32 %v287, 1e-24
    %v290 = vrsqrt.pop %v288
    %v291 = vrsqrt.pop %v289
    %v292 = vmul.f32 %v274, %v290
    %v293 = vmul.f32 %v279, %v291
    %v294 = vmul.f32 %v130, 0.5
    %v295 = vmul.f32 %v135, 0.5
    %v296 = vmul.f32 %v292, 0.5
    %v297 = vmul.f32 %v293, 0.5
    %v298 = vadd.f32 %v294, %v296
    %v299 = vadd.f32 %v295, %v297
    %300 = vst [vmem:[#allocation5] sm:$0xff] %v298
    %301 = vst [vmem:[#allocation5 + $0x8] sm:$0xff] %v299
    // Predicated region
    $region22: #{tpu_custom_call.1} parent=1 // pred_check
      _
    $region23: #{tpu_custom_call.1} parent=1 // pred_check_branch
      %303 = sbr.rel (0) target = $region25
    $region24: #{tpu_custom_call.1} parent=1 // pred_region
      %s305 = ssub.s32 256, 256
      %306 = vsyncadd [#allocation4], %s305
      %s307 = sshll.u32 [#allocation5], 4
      %s308 = int_to_ptr.vmem [resolvable:$true] %s307
      %313 = dma.vmem_to_hbm [thread:$0]  %s308, 256, %s4, [#allocation4], 128, 128, 8
    $region25: #{tpu_custom_call.1} parent=1 // pred_fallthru
      _
    // Predicated region
    $region26: #{tpu_custom_call.1} parent=1 // pred_check
      _
    $region27: #{tpu_custom_call.1} parent=1 // pred_check_branch
      %315 = sbr.rel (0) target = $region29
    $region28: #{tpu_custom_call.1} parent=1 // pred_region
      %316 = dma.done [#allocation4], 256
    $region29: #{tpu_custom_call.1} parent=1 // pred_fallthru
      _
    %317 = vsyncpa [#allocation3], 1
    %318 = vsyncpa [#allocation4], 1

</llo_original>
